<compile_context>
chip_gen: v7x
topology: tpu7x:2x2x1
jax: 0.10.0
libtpu: 0.0.40
codegen_flags: <defaults>
</compile_context>

<pallas_src>
import functools
import math

import jax
import jax.numpy as jnp
from jax.experimental import pallas as pl
from jax.experimental.pallas import tpu as pltpu


def _round_up(x, m):
    return (x + m - 1) // m * m


def _cdiv(a, b):
    return -(-a // b)


def _nbytes(a):
    return a.size * a.dtype.itemsize


def _distill_kernel(needs_mask, two_sh,
                    n_ref,                                   # scalar prefetch [N]
                    x_ref,                                   # (tm, 4H) packed [k|v|k|v]
                    w1_ref, b1_ref, w2_ref, b2_ref, we_ref, be_ref,
                    out_ref, loss_ref):
    f32 = jnp.float32
    i = pl.program_id(0)
    tm = x_ref.shape[0]

    x = x_ref[...]                                           # bf16, lane-dense

    # Stage 1: fused teacher+student projections (both tokens, K & V paths).
    # bf16 x bf16 MXU, f32 accumulate; bias add + ReLU on the VPU in f32.
    h = jnp.maximum(
        jnp.dot(x, w1_ref[...], preferred_element_type=f32) + b1_ref[...], 0.0)

    # Stage 2: fused output projections with alpha already folded into W2/b2.
    out = (jnp.dot(h.astype(x.dtype), w2_ref[...], preferred_element_type=f32)
           + b2_ref[...])
    out_ref[...] = out.astype(out_ref.dtype)

    # Distillation error: err = [skh - key_distill(tkh) | svh - value_distill(tvh)]
    # Kept in f32 because We embeds identity blocks routing skh/svh through.
    err = jnp.dot(h, we_ref[...], preferred_element_type=f32) + be_ref[...]
    sq = err * err

    if needs_mask:
        # Only emitted when the static shapes actually have padded/OOB tokens.
        # Each packed row carries 2 tokens: lane < two_sh -> token 2r, else 2r+1.
        rows = jax.lax.broadcasted_iota(jnp.int32, sq.shape, 0) + i * tm
        off = (jax.lax.broadcasted_iota(jnp.int32, sq.shape, 1)
               >= two_sh).astype(jnp.int32)
        tok = 2 * rows + off
        sq = jnp.where(tok < n_ref[0], sq, 0.0)              # select, not multiply

    # Per-tile partial loss block (distinct block per grid step => "parallel" ok).
    loss_ref[...] = jnp.broadcast_to(jnp.sum(sq), loss_ref.shape)


def _fuse_params(params, alpha, mxu_dtype=jnp.bfloat16):
    """Fold the 10 Linear layers into 3 fused matrices, then block-diag
    duplicate them for the 2-tokens-per-row packing."""
    (wtk_p, btk_p, wtk_o, btk_o,
     wtv_p, btv_p, wtv_o, btv_o,
     wsk_p, bsk_p, wsk_o, bsk_o,
     wsv_p, bsv_p, wsv_o, bsv_o,
     wkd, bkd, wvd, bvd) = params
    f32 = jnp.float32
    H, TH = wtk_p.shape
    SH = wsk_p.shape[1]
    a = jnp.float32(alpha)
    oma = jnp.float32(1.0 - alpha)

    def blockdiag(m0, m1):
        z01 = jnp.zeros((m0.shape[0], m1.shape[1]), f32)
        z10 = jnp.zeros((m1.shape[0], m0.shape[1]), f32)
        return jnp.concatenate(
            [jnp.concatenate([m0, z01], axis=1),
             jnp.concatenate([z10, m1], axis=1)], axis=0)

    # Stage-1: [k|v] -> [tkh|skh|tvh|svh]          (2H, 2F)
    wk_in = jnp.concatenate([wtk_p, wsk_p], axis=1)              # (H, F)
    wv_in = jnp.concatenate([wtv_p, wsv_p], axis=1)              # (H, F)
    w1 = blockdiag(wk_in, wv_in)                                 # (2H, 2F)
    b1 = jnp.concatenate([btk_p, bsk_p, btv_p, bsv_p], axis=1)   # (1, 2F)

    # Stage-2: alpha folded into output projections  (2F, 2H)
    wk_out = jnp.concatenate([a * wtk_o, oma * wsk_o], axis=0)   # (F, H)
    wv_out = jnp.concatenate([a * wtv_o, oma * wsv_o], axis=0)   # (F, H)
    w2 = blockdiag(wk_out, wv_out)                               # (2F, 2H)
    b2 = jnp.concatenate([a * btk_o + oma * bsk_o,
                          a * btv_o + oma * bsv_o], axis=1)      # (1, 2H)

    # Error projection: err = [tkh|skh] @ [[-wkd],[I]] - bkd (and same for V).
    eye = jnp.eye(SH, dtype=f32)
    wk_err = jnp.concatenate([-wkd, eye], axis=0)                # (F, SH)
    wv_err = jnp.concatenate([-wvd, eye], axis=0)                # (F, SH)
    we = blockdiag(wk_err, wv_err)                               # (2F, 2SH)
    be = jnp.concatenate([-bkd, -bvd], axis=1)                   # (1, 2SH)

    # 2-token packing: one (.., 4H) row processes two tokens at once.
    w1p = blockdiag(w1, w1).astype(mxu_dtype)                    # (4H, 4F) bf16
    b1p = jnp.concatenate([b1, b1], axis=1)                      # (1, 4F)  f32
    w2p = blockdiag(w2, w2).astype(mxu_dtype)                    # (4F, 4H) bf16
    b2p = jnp.concatenate([b2, b2], axis=1)                      # (1, 4H)  f32
    wep = blockdiag(we, we)                                      # (4F, 4SH) f32
    bep = jnp.concatenate([be, be], axis=1)                      # (1, 4SH)  f32
    return (w1p, b1p, w2p, b2p, wep, bep), SH


def distillation_compressor_forward(keys, values, params, *, alpha, tm=1024,
                                    mxu_dtype=jnp.bfloat16):
    """keys/values: [B, S, H].  Returns (compressed_keys, compressed_values, loss)."""
    B, S, H = keys.shape
    N = B * S

    (w1, b1, w2, b2, we, be), SH = _fuse_params(params, alpha, mxu_dtype)

    # 2 tokens per packed row; pad only to the 16-row (bf16 sublane) boundary.
    nrow = _cdiv(N, 2)
    nrow_p = _round_up(nrow, 16)

    # Row tile (~tm tokens), capped so the grid keeps >=4 steps when there is
    # enough work (v7x megacore has 2 TCs sharding the "parallel" axis).
    tmr = min(_round_up(max(tm // 2, 16), 16), nrow_p)
    tmr = max(16, min(tmr, _round_up(_cdiv(nrow_p, 4), 16)))
    G = _cdiv(nrow_p, tmr)
    needs_mask = (N != 2 * G * tmr)

    # Single fused host prep pass: concat + tiny pad + pack + one bf16 cast.
    x = jnp.concatenate([keys.reshape(N, H), values.reshape(N, H)], axis=-1)
    pad_tok = 2 * nrow_p - N
    if pad_tok:
        x = jnp.pad(x, ((0, pad_tok), (0, 0)))
    xp = x.reshape(nrow_p, 4 * H).astype(mxu_dtype)              # (rows, 128)

    n_valid = jnp.array([N], jnp.int32)                          # scalar prefetch

    tok_spec = pl.BlockSpec((tmr, 4 * H), lambda i, n: (i, 0))
    # Weights/biases are small and resident; default buffering is negligible VMEM.
    full = lambda arr: pl.BlockSpec(arr.shape, lambda i, n: (0,) * arr.ndim)

    out_dtype = keys.dtype
    out_shape = (
        jax.ShapeDtypeStruct((nrow_p, 4 * H), out_dtype),        # [ck|cv|ck|cv]
        jax.ShapeDtypeStruct((G * 8, 128), jnp.float32),         # per-tile loss
    )
    out_specs = (
        pl.BlockSpec((tmr, 4 * H), lambda i, n: (i, 0)),
        pl.BlockSpec((8, 128), lambda i, n: (i, 0)),
    )

    cost = pl.CostEstimate(
        flops=2 * nrow_p * (w1.shape[0] * w1.shape[1]
                            + w2.shape[0] * w2.shape[1]
                            + we.shape[0] * we.shape[1]),
        transcendentals=0,
        bytes_accessed=(_nbytes(xp)
                        + nrow_p * 4 * H * jnp.dtype(out_dtype).itemsize
                        + sum(_nbytes(a) for a in (w1, b1, w2, b2, we, be))
                        + G * 8 * 128 * 4),
    )

    kern = functools.partial(_distill_kernel, needs_mask, 2 * SH)

    out, loss_part = pl.pallas_call(
        kern,
        out_shape=out_shape,
        grid_spec=pltpu.PrefetchScalarGridSpec(
            num_scalar_prefetch=1,
            grid=(G,),
            in_specs=[tok_spec,
                      full(w1), full(b1), full(w2), full(b2),
                      full(we), full(be)],
            out_specs=out_specs,
        ),
        compiler_params=pltpu.CompilerParams(
            dimension_semantics=("parallel",)),
        cost_estimate=cost,
    )(n_valid, xp, w1, b1, w2, b2, we, be)

    # Free contiguous reshape back to one row per token, then unpack K / V.
    # TODO(synk): downstream consumers could take the fused (N, 2H) buffer
    # directly and skip these two unpack slices entirely.
    out2 = out.reshape(2 * nrow_p, 2 * H)
    ck = out2[:N, :H].reshape(B, S, H)
    cv = out2[:N, H:].reshape(B, S, H)

    # F.mse_loss uses mean over N*SH elements for each of the two terms.
    partials = loss_part.reshape(G, 8, 128)[:, 0, 0]
    distill_loss = jnp.sum(partials) / jnp.float32(N * SH)
    return ck, cv, distill_loss


def _xavier_normal(key, fan_in, fan_out):
    # nn.init.xavier_normal_ on an (out, in) weight; returned in the transposed
    # (in, out) layout used by the kernel's x @ W convention.
    std = math.sqrt(2.0 / (fan_in + fan_out))
    return jax.random.normal(key, (fan_in, fan_out), jnp.float32) * std


def make_params(key, hidden, teacher_hidden, student_hidden):
    ks = jax.random.split(key, 10)
    H, TH, SH = hidden, teacher_hidden, student_hidden
    zeros = lambda n: jnp.zeros((1, n), jnp.float32)
    params = (
        _xavier_normal(ks[0], H, TH), zeros(TH),   # teacher_key_proj
        _xavier_normal(ks[1], TH, H), zeros(H),    # teacher_key_output
        _xavier_normal(ks[2], H, TH), zeros(TH),   # teacher_value_proj
        _xavier_normal(ks[3], TH, H), zeros(H),    # teacher_value_output
        _xavier_normal(ks[4], H, SH), zeros(SH),   # student_key_proj
        _xavier_normal(ks[5], SH, H), zeros(H),    # student_key_output
        _xavier_normal(ks[6], H, SH), zeros(SH),   # student_value_proj
        _xavier_normal(ks[7], SH, H), zeros(H),    # student_value_output
        _xavier_normal(ks[8], TH, SH), zeros(SH),  # key_distill_proj
        _xavier_normal(ks[9], TH, SH), zeros(SH),  # value_distill_proj
    )
    return params


if __name__ == "__main__":
    hidden_size = 32
    teacher_hidden = hidden_size * 2      # 64
    student_hidden = hidden_size // 2     # 16
    alpha = 0.7
    B, S = 2, 8

    root = jax.random.PRNGKey(0)
    k_key, v_key, p_key = jax.random.split(root, 3)

    keys = jax.random.normal(k_key, (B, S, hidden_size), jnp.float32)
    values = jax.random.normal(v_key, (B, S, hidden_size), jnp.float32)
    params = make_params(p_key, hidden_size, teacher_hidden, student_hidden)

    ck, cv, loss = distillation_compressor_forward(
        keys, values, params, alpha=alpha, tm=1024)
    jax.block_until_ready((ck, cv, loss))

    # Cross-check against a plain-JAX f32 reference of the unfused module math.
    def ref(keys, values, params):
        (wtk_p, btk_p, wtk_o, btk_o, wtv_p, btv_p, wtv_o, btv_o,
         wsk_p, bsk_p, wsk_o, bsk_o, wsv_p, bsv_p, wsv_o, bsv_o,
         wkd, bkd, wvd, bvd) = params
        relu = jax.nn.relu
        tkh = relu(keys @ wtk_p + btk_p); tvh = relu(values @ wtv_p + btv_p)
        tko = tkh @ wtk_o + btk_o;        tvo = tvh @ wtv_o + btv_o
        skh = relu(keys @ wsk_p + bsk_p); svh = relu(values @ wsv_p + bsv_p)
        sko = skh @ wsk_o + bsk_o;        svo = svh @ wsv_o + bsv_o
        tkp = tkh @ wkd + bkd;            tvp = tvh @ wvd + bvd
        l = jnp.mean((skh - tkp) ** 2) + jnp.mean((svh - tvp) ** 2)
        return (alpha * tko + (1 - alpha) * sko,
                alpha * tvo + (1 - alpha) * svo, l)

    rk, rv, rl = ref(keys, values, params)
    # Tolerances reflect bf16 MXU operands on the main path (review item #2).
    assert jnp.allclose(ck, rk, atol=5e-2, rtol=5e-2)
    assert jnp.allclose(cv, rv, atol=5e-2, rtol=5e-2)
    assert jnp.allclose(loss, rl, atol=5e-2, rtol=5e-2)

    print("KERNEL_OK")
</pallas_src>

<mosaic_0001>
module attributes {stable_mosaic.version = 11 : i64} {
  func.func @_distill_kernel(%arg0: i32, %arg1: memref<1xi32, #tpu.memory_space<smem>>, %arg2: memref<16x128xbf16, #tpu.memory_space<vmem>>, %arg3: memref<128x320xbf16, #tpu.memory_space<vmem>>, %arg4: memref<1x320xf32, #tpu.memory_space<vmem>>, %arg5: memref<320x128xbf16, #tpu.memory_space<vmem>>, %arg6: memref<1x128xf32, #tpu.memory_space<vmem>>, %arg7: memref<320x64xf32, #tpu.memory_space<vmem>>, %arg8: memref<1x64xf32, #tpu.memory_space<vmem>>, %arg9: memref<16x128xf32, #tpu.memory_space<vmem>>, %arg10: memref<8x128xf32, #tpu.memory_space<vmem>>) attributes {dimension_semantics = [#tpu.dimension_semantics<parallel>], iteration_bounds = array<i64: 1>, scalar_prefetch = 1 : i64, scratch_operands = 0 : i64, tpu.core_type = #tpu.core_type<tc>, window_params = [{transform_indices = @transform_0, window_bounds = array<i64: 16, 128>}, {pipeline_mode = #tpu.pipeline_mode<synchronous>, transform_indices = @transform_1, window_bounds = array<i64: 128, 320>}, {pipeline_mode = #tpu.pipeline_mode<synchronous>, transform_indices = @transform_2, window_bounds = array<i64: 1, 320>}, {pipeline_mode = #tpu.pipeline_mode<synchronous>, transform_indices = @transform_3, window_bounds = array<i64: 320, 128>}, {pipeline_mode = #tpu.pipeline_mode<synchronous>, transform_indices = @transform_4, window_bounds = array<i64: 1, 128>}, {pipeline_mode = #tpu.pipeline_mode<synchronous>, transform_indices = @transform_5, window_bounds = array<i64: 320, 64>}, {pipeline_mode = #tpu.pipeline_mode<synchronous>, transform_indices = @transform_6, window_bounds = array<i64: 1, 64>}, {transform_indices = @transform_7, window_bounds = array<i64: 16, 128>}, {transform_indices = @transform_8, window_bounds = array<i64: 8, 128>}]} {
    %c0 = arith.constant 0 : index
    %c0_0 = arith.constant 0 : index
    %0 = vector.load %arg2[%c0, %c0_0] : memref<16x128xbf16, #tpu.memory_space<vmem>>, vector<16x128xbf16>
    %c0_1 = arith.constant 0 : index
    %c0_2 = arith.constant 0 : index
    %1 = vector.load %arg3[%c0_1, %c0_2] : memref<128x320xbf16, #tpu.memory_space<vmem>>, vector<128x320xbf16>
    %cst = arith.constant dense<0.000000e+00> : vector<16x320xf32>
    %2 = tpu.matmul %0, %1, %cst {dimension_numbers = #tpu.dot_dimension_numbers<[1], [0], [0], [1], [0, 0, 1, 1], [], []>} : vector<16x128xbf16>, vector<128x320xbf16>, vector<16x320xf32> -> vector<16x320xf32>
    %c0_3 = arith.constant 0 : index
    %c0_4 = arith.constant 0 : index
    %3 = vector.load %arg4[%c0_3, %c0_4] : memref<1x320xf32, #tpu.memory_space<vmem>>, vector<1x320xf32>
    %4 = vector.broadcast %3 : vector<1x320xf32> to vector<16x320xf32>
    %5 = arith.addf %2, %4 : vector<16x320xf32>
    %cst_5 = arith.constant 0.000000e+00 : f32
    %6 = vector.broadcast %cst_5 : f32 to vector<16x320xf32>
    %7 = arith.maximumf %5, %6 : vector<16x320xf32>
    %8 = arith.truncf %7 : vector<16x320xf32> to vector<16x320xbf16>
    %c0_6 = arith.constant 0 : index
    %c0_7 = arith.constant 0 : index
    %9 = vector.load %arg5[%c0_6, %c0_7] : memref<320x128xbf16, #tpu.memory_space<vmem>>, vector<320x128xbf16>
    %cst_8 = arith.constant dense<0.000000e+00> : vector<16x128xf32>
    %10 = tpu.matmul %8, %9, %cst_8 {dimension_numbers = #tpu.dot_dimension_numbers<[1], [0], [0], [1], [0, 0, 1, 1], [], []>} : vector<16x320xbf16>, vector<320x128xbf16>, vector<16x128xf32> -> vector<16x128xf32>
    %c0_9 = arith.constant 0 : index
    %c0_10 = arith.constant 0 : index
    %11 = vector.load %arg6[%c0_9, %c0_10] : memref<1x128xf32, #tpu.memory_space<vmem>>, vector<1x128xf32>
    %12 = vector.broadcast %11 : vector<1x128xf32> to vector<16x128xf32>
    %13 = arith.addf %10, %12 : vector<16x128xf32>
    %c0_11 = arith.constant 0 : index
    %c0_12 = arith.constant 0 : index
    %14 = vector.load %arg9[%c0_11, %c0_12] : memref<16x128xf32, #tpu.memory_space<vmem>>, vector<16x128xf32>
    tpu.vector_store %arg9[%c0_11, %c0_12], %13 {strides = array<i32>} : memref<16x128xf32, #tpu.memory_space<vmem>>, vector<16x128xf32>,
    %c0_13 = arith.constant 0 : index
    %c0_14 = arith.constant 0 : index
    %15 = vector.load %arg7[%c0_13, %c0_14] : memref<320x64xf32, #tpu.memory_space<vmem>>, vector<320x64xf32>
    %cst_15 = arith.constant dense<0.000000e+00> : vector<16x64xf32>
    %16 = tpu.matmul %7, %15, %cst_15 {dimension_numbers = #tpu.dot_dimension_numbers<[1], [0], [0], [1], [0, 0, 1, 1], [], []>} : vector<16x320xf32>, vector<320x64xf32>, vector<16x64xf32> -> vector<16x64xf32>
    %c0_16 = arith.constant 0 : index
    %c0_17 = arith.constant 0 : index
    %17 = vector.load %arg8[%c0_16, %c0_17] : memref<1x64xf32, #tpu.memory_space<vmem>>, vector<1x64xf32>
    %18 = vector.broadcast %17 : vector<1x64xf32> to vector<16x64xf32>
    %19 = arith.addf %16, %18 : vector<16x64xf32>
    %20 = arith.mulf %19, %19 : vector<16x64xf32>
    %21 = tpu.iota {dimensions = array<i32: 0>} : vector<16x64xi32>
    %c16_i32 = arith.constant 16 : i32
    %22 = arith.muli %arg0, %c16_i32 : i32
    %23 = vector.broadcast %22 : i32 to vector<16x64xi32>
    %24 = arith.addi %21, %23 : vector<16x64xi32>
    %25 = tpu.iota {dimensions = array<i32: 1>} : vector<16x64xi32>
    %c32_i32 = arith.constant 32 : i32
    %26 = vector.broadcast %c32_i32 : i32 to vector<16x64xi32>
    %27 = arith.cmpi sge, %25, %26 : vector<16x64xi32>
    %28 = arith.extui %27 : vector<16x64xi1> to vector<16x64xi32>
    %c2_i32 = arith.constant 2 : i32
    %29 = vector.broadcast %c2_i32 : i32 to vector<16x64xi32>
    %30 = arith.muli %29, %24 : vector<16x64xi32>
    %31 = arith.addi %30, %28 : vector<16x64xi32>
    %c0_18 = arith.constant 0 : index
    %32 = memref.load %arg1[%c0_18] : memref<1xi32, #tpu.memory_space<smem>>
    %33 = vector.broadcast %32 : i32 to vector<16x64xi32>
    %34 = arith.cmpi slt, %31, %33 : vector<16x64xi32>
    %cst_19 = arith.constant 0.000000e+00 : f32
    %35 = vector.broadcast %cst_19 : f32 to vector<16x64xf32>
    %36 = arith.select %34, %20, %35 : vector<16x64xi1>, vector<16x64xf32>
    %37 = vector.shape_cast %36 : vector<16x64xf32> to vector<1x16x64xf32>
    %cst_20 = arith.constant dense<0.000000e+00> : vector<1xf32>
    %38 = vector.multi_reduction <add>, %37, %cst_20 [1, 2] : vector<1x16x64xf32> to vector<1xf32>
    %39 = vector.shape_cast %38 : vector<1xf32> to vector<1x1x1xf32>
    %40 = vector.extract %39[0, 0, 0] : f32 from vector<1x1x1xf32>
    %41 = vector.broadcast %40 : f32 to vector<8x128xf32>
    %c0_21 = arith.constant 0 : index
    %c0_22 = arith.constant 0 : index
    %42 = vector.load %arg10[%c0_21, %c0_22] : memref<8x128xf32, #tpu.memory_space<vmem>>, vector<8x128xf32>
    tpu.vector_store %arg10[%c0_21, %c0_22], %41 {strides = array<i32>} : memref<8x128xf32, #tpu.memory_space<vmem>>, vector<8x128xf32>,
    return
  }
  func.func @transform_0(%arg0: i32, %arg1: memref<1xi32, #tpu.memory_space<smem>>) -> (i32, i32) {
    %c0_i32 = arith.constant 0 : i32
    %c0_i32_0 = arith.constant 0 : i32
    return %arg0, %c0_i32 : i32, i32
  }
  func.func @transform_1(%arg0: i32, %arg1: memref<1xi32, #tpu.memory_space<smem>>) -> (i32, i32) {
    %c0_i32 = arith.constant 0 : i32
    %c0_i32_0 = arith.constant 0 : i32
    %c0_i32_1 = arith.constant 0 : i32
    return %c0_i32, %c0_i32_0 : i32, i32
  }
  func.func @transform_2(%arg0: i32, %arg1: memref<1xi32, #tpu.memory_space<smem>>) -> (i32, i32) {
    %c0_i32 = arith.constant 0 : i32
    %c0_i32_0 = arith.constant 0 : i32
    %c0_i32_1 = arith.constant 0 : i32
    return %c0_i32, %c0_i32_0 : i32, i32
  }
  func.func @transform_3(%arg0: i32, %arg1: memref<1xi32, #tpu.memory_space<smem>>) -> (i32, i32) {
    %c0_i32 = arith.constant 0 : i32
    %c0_i32_0 = arith.constant 0 : i32
    %c0_i32_1 = arith.constant 0 : i32
    return %c0_i32, %c0_i32_0 : i32, i32
  }
  func.func @transform_4(%arg0: i32, %arg1: memref<1xi32, #tpu.memory_space<smem>>) -> (i32, i32) {
    %c0_i32 = arith.constant 0 : i32
    %c0_i32_0 = arith.constant 0 : i32
    %c0_i32_1 = arith.constant 0 : i32
    return %c0_i32, %c0_i32_0 : i32, i32
  }
  func.func @transform_5(%arg0: i32, %arg1: memref<1xi32, #tpu.memory_space<smem>>) -> (i32, i32) {
    %c0_i32 = arith.constant 0 : i32
    %c0_i32_0 = arith.constant 0 : i32
    %c0_i32_1 = arith.constant 0 : i32
    return %c0_i32, %c0_i32_0 : i32, i32
  }
  func.func @transform_6(%arg0: i32, %arg1: memref<1xi32, #tpu.memory_space<smem>>) -> (i32, i32) {
    %c0_i32 = arith.constant 0 : i32
    %c0_i32_0 = arith.constant 0 : i32
    %c0_i32_1 = arith.constant 0 : i32
    return %c0_i32, %c0_i32_0 : i32, i32
  }
  func.func @transform_7(%arg0: i32, %arg1: memref<1xi32, #tpu.memory_space<smem>>) -> (i32, i32) {
    %c0_i32 = arith.constant 0 : i32
    %c0_i32_0 = arith.constant 0 : i32
    return %arg0, %c0_i32 : i32, i32
  }
  func.func @transform_8(%arg0: i32, %arg1: memref<1xi32, #tpu.memory_space<smem>>) -> (i32, i32) {
    %c0_i32 = arith.constant 0 : i32
    %c0_i32_0 = arith.constant 0 : i32
    return %arg0, %c0_i32 : i32, i32
  }
}

</mosaic_0001>

<llo_original>
// kernel: tpu_custom_call.1
$region0: #{tpu_custom_call.1}
  #allocation0 [shape = 'u32[]', space=smem, size = 0x4, offset = 0x4, fixed_abs, tag = 'smem constant byte address 0x4 - core index']
  #allocation1 [shape = 'u32[144,128]{1,0:T(1,128)}', space=vmem, size = 0x12000, scoped, tag = 'internal scratch']
  #allocation2 [shape = 's32[1]{0}', space=sflag, size = 0x4, scoped, tag = 'scoped memory for tpu_custom_call.1']
  #allocation3 [shape = 's32[1]{0:T(128)S(6)}', space=smem, size = 0x200, scoped, tag = 'prefetched SMEM operand 0']
  %s0 = inlined_call_operand.<no memory space> [shape: s32[1], index: 0, kind: input, shape index: {}]
  %s1 = inlined_call_operand.vmem [shape: bf16[16,128], index: 1, kind: input, shape index: {}]
  %s2 = inlined_call_operand.vmem [shape: bf16[128,320], index: 2, kind: input, shape index: {}]
  %s3 = inlined_call_operand.vmem [shape: f32[1,320], index: 3, kind: input, shape index: {}]
  %s4 = inlined_call_operand.vmem [shape: bf16[320,128], index: 4, kind: input, shape index: {}]
  %s5 = inlined_call_operand.vmem [shape: f32[1,128], index: 5, kind: input, shape index: {}]
  %s6 = inlined_call_operand.vmem [shape: f32[320,64], index: 6, kind: input, shape index: {}]
  %s7 = inlined_call_operand.vmem [shape: f32[1,64], index: 7, kind: input, shape index: {}]
  %s8 = inlined_call_operand.hbm [shape: f32[16,128], index: 8, kind: output, shape index: {0}]
  %s9 = inlined_call_operand.hbm [shape: f32[8,128], index: 9, kind: output, shape index: {1}]
  %10 = xla_tuple %s8, %s9
  %s11 = sld [smem:[#allocation0]]
  $region46: #{tpu_custom_call.1} parent=0
    _
  %s13 = ssub.s32 1, %s11
  %s14 = scalar_select 0, %s13, %s11
  %15 = sst [smem:[#allocation3]] %s0
  $region1: #{tpu_custom_call.1} parent=0
    #allocation4 [shape = 'u8[8192]{0}', space=vmem, size = 0x2000, scoped, tag = 'output window, operand 0, single buffered']
    #allocation5 [shape = 's32[1]{0}', space=sflag, size = 0x4, scoped, tag = 'scoped memory for tpu_custom_call.1']
    #allocation6 [shape = 'u8[4096]{0}', space=vmem, size = 0x1000, scoped, tag = 'output window, operand 1, single buffered']
    #allocation7 [shape = 's32[1]{0}', space=sflag, size = 0x4, scoped, tag = 'scoped memory for tpu_custom_call.1']
    %16 = vsyncpa [#allocation5], 0
    %17 = vsyncpa [#allocation7], 0
    // Predicated region
    $region2: #{tpu_custom_call.1} parent=1 // pred_check
      _
    $region3: #{tpu_custom_call.1} parent=1 // pred_check_branch
      %19 = sbr.rel (0) target = $region5
    $region4: #{tpu_custom_call.1} parent=1 // pred_region
      _
    $region5: #{tpu_custom_call.1} parent=1 // pred_fallthru
      _
    // Predicated region
    $region6: #{tpu_custom_call.1} parent=1 // pred_check
      _
    $region7: #{tpu_custom_call.1} parent=1 // pred_check_branch
      %21 = sbr.rel (0) target = $region9
    $region8: #{tpu_custom_call.1} parent=1 // pred_region
      _
    $region9: #{tpu_custom_call.1} parent=1 // pred_fallthru
      _
    // Predicated region
    $region10: #{tpu_custom_call.1} parent=1 // pred_check
      _
    $region11: #{tpu_custom_call.1} parent=1 // pred_check_branch
      %23 = sbr.rel (0) target = $region13
    $region12: #{tpu_custom_call.1} parent=1 // pred_region
      _
    $region13: #{tpu_custom_call.1} parent=1 // pred_fallthru
      _
    // Predicated region
    $region14: #{tpu_custom_call.1} parent=1 // pred_check
      _
    $region15: #{tpu_custom_call.1} parent=1 // pred_check_branch
      %25 = sbr.rel (0) target = $region17
    $region16: #{tpu_custom_call.1} parent=1 // pred_region
      _
    $region17: #{tpu_custom_call.1} parent=1 // pred_fallthru
      _
    // Predicated region
    $region18: #{tpu_custom_call.1} parent=1 // pred_check
      _
    $region19: #{tpu_custom_call.1} parent=1 // pred_check_branch
      %27 = sbr.rel (0) target = $region21
    $region20: #{tpu_custom_call.1} parent=1 // pred_region
      _
    $region21: #{tpu_custom_call.1} parent=1 // pred_fallthru
      _
    // Predicated region
    $region22: #{tpu_custom_call.1} parent=1 // pred_check
      _
    $region23: #{tpu_custom_call.1} parent=1 // pred_check_branch
      %29 = sbr.rel (0) target = $region25
    $region24: #{tpu_custom_call.1} parent=1 // pred_region
      _
    $region25: #{tpu_custom_call.1} parent=1 // pred_fallthru
      _
    // Predicated region
    $region26: #{tpu_custom_call.1} parent=1 // pred_check
      _
    $region27: #{tpu_custom_call.1} parent=1 // pred_check_branch
      %31 = sbr.rel (0) target = $region29
    $region28: #{tpu_custom_call.1} parent=1 // pred_region
      _
    $region29: #{tpu_custom_call.1} parent=1 // pred_fallthru
      _
    %v33 = vld [vmem:[%s1] sm:$0xf]
    %v34 = vld [vmem:[%s1 + $0x4] sm:$0xf]
    %v35 = vld [vmem:[%s2] sm:$0xff]
    %v36 = vld [vmem:[%s2 + $0x8] sm:$0xf]
    %v37 = vld [vmem:[%s2 + $0xc] sm:$0xff]
    %v38 = vld [vmem:[%s2 + $0x14] sm:$0xf]
    %v39 = vld [vmem:[%s2 + $0x18] sm:$0xff]
    %v40 = vld [vmem:[%s2 + $0x20] sm:$0xf]
    %v41 = vld [vmem:[%s2 + $0x24] sm:$0xff]
    %v42 = vld [vmem:[%s2 + $0x2c] sm:$0xf]
    %v43 = vld [vmem:[%s2 + $0x30] sm:$0xff]
    %v44 = vld [vmem:[%s2 + $0x38] sm:$0xf]
    %v45 = vld [vmem:[%s2 + $0x3c] sm:$0xff]
    %v46 = vld [vmem:[%s2 + $0x44] sm:$0xf]
    %v47 = vld [vmem:[%s2 + $0x48] sm:$0xff]
    %v48 = vld [vmem:[%s2 + $0x50] sm:$0xf]
    %v49 = vld [vmem:[%s2 + $0x54] sm:$0xff]
    %v50 = vld [vmem:[%s2 + $0x5c] sm:$0xf]
    %v51 = vld [vmem:[%s2 + $0x60] sm:$0xff]
    %v52 = vld [vmem:[%s2 + $0x68] sm:$0xf]
    %v53 = vld [vmem:[%s2 + $0x6c] sm:$0xff]
    %v54 = vld [vmem:[%s2 + $0x74] sm:$0xf]
    %v55 = vld [vmem:[%s2 + $0x78] sm:$0xff]
    %v56 = vld [vmem:[%s2 + $0x80] sm:$0xf]
    %v57 = vld [vmem:[%s2 + $0x84] sm:$0xff]
    %v58 = vld [vmem:[%s2 + $0x8c] sm:$0xf]
    %v59 = vld [vmem:[%s2 + $0x90] sm:$0xff]
    %v60 = vld [vmem:[%s2 + $0x98] sm:$0xf]
    %v61 = vld [vmem:[%s2 + $0x9c] sm:$0xff]
    %v62 = vld [vmem:[%s2 + $0xa4] sm:$0xf]
    %v63 = vld [vmem:[%s2 + $0xa8] sm:$0xff]
    %v64 = vld [vmem:[%s2 + $0xb0] sm:$0xf]
    %v65 = vld [vmem:[%s2 + $0xb4] sm:$0xff]
    %v66 = vld [vmem:[%s2 + $0xbc] sm:$0xf]
    %v67 = vld [vmem:[%s3] sm:$0x7]
    %v69 = vlaneseq
    %v70 = vshrl.u32 %v69, 7
    %v71 = vsub.s32 0, %v70
    %v72 = vrot.slane %v67, %v71
    %v73 = vlaneseq
    %v74 = vshrl.u32 %v73, 7
    %v75 = vsub.s32 1, %v74
    %v76 = vrot.slane %v67, %v75
    %v77 = vlaneseq
    %v78 = vshrl.u32 %v77, 7
    %v79 = vsub.s32 2, %v78
    %v80 = vrot.slane %v67, %v79
    %v86 = vunpack.c.l.b16 %v33
    %v87 = vunpack.c.l.b16 %v34
    %v88 = vpack.c.b16 %v87, %v86
    %v122 = vunpack.c.l.b16 %v35
    %v123 = vunpack.c.h.b16 %v35
    %v124 = vunpack.c.l.b16 %v36
    %v125 = vunpack.c.l.b16 %v37
    %v126 = vunpack.c.h.b16 %v37
    %v127 = vunpack.c.l.b16 %v38
    %v128 = vunpack.c.l.b16 %v39
    %v129 = vunpack.c.h.b16 %v39
    %v130 = vunpack.c.l.b16 %v40
    %v131 = vunpack.c.l.b16 %v41
    %v132 = vunpack.c.h.b16 %v41
    %v133 = vunpack.c.l.b16 %v42
    %v134 = vunpack.c.l.b16 %v43
    %v135 = vunpack.c.h.b16 %v43
    %v136 = vunpack.c.l.b16 %v44
    %v137 = vunpack.c.l.b16 %v45
    %v138 = vunpack.c.h.b16 %v45
    %v139 = vunpack.c.l.b16 %v46
    %v140 = vunpack.c.l.b16 %v47
    %v141 = vunpack.c.h.b16 %v47
    %v142 = vunpack.c.l.b16 %v48
    %v143 = vunpack.c.l.b16 %v49
    %v144 = vunpack.c.h.b16 %v49
    %v145 = vunpack.c.l.b16 %v50
    %v146 = vunpack.c.l.b16 %v51
    %v147 = vunpack.c.h.b16 %v51
    %v148 = vunpack.c.l.b16 %v52
    %v149 = vunpack.c.l.b16 %v53
    %v150 = vunpack.c.h.b16 %v53
    %v151 = vunpack.c.l.b16 %v54
    %v152 = vunpack.c.l.b16 %v55
    %v153 = vunpack.c.h.b16 %v55
    %v154 = vunpack.c.l.b16 %v56
    %v155 = vunpack.c.l.b16 %v57
    %v156 = vunpack.c.h.b16 %v57
    %v157 = vunpack.c.l.b16 %v58
    %v158 = vunpack.c.l.b16 %v59
    %v159 = vunpack.c.h.b16 %v59
    %v160 = vunpack.c.l.b16 %v60
    %v161 = vunpack.c.l.b16 %v61
    %v162 = vunpack.c.h.b16 %v61
    %v163 = vunpack.c.l.b16 %v62
    %v164 = vunpack.c.l.b16 %v63
    %v165 = vunpack.c.h.b16 %v63
    %v166 = vunpack.c.l.b16 %v64
    %v167 = vunpack.c.l.b16 %v65
    %v168 = vunpack.c.h.b16 %v65
    %v169 = vunpack.c.l.b16 %v66
    %v170 = vpack.c.b16 %v125, %v122
    %v171 = vpack.c.b16 %v126, %v123
    %v172 = vpack.c.b16 %v127, %v124
    %v173 = vpack.c.b16 %v131, %v128
    %v174 = vpack.c.b16 %v132, %v129
    %v175 = vpack.c.b16 %v133, %v130
    %v176 = vpack.c.b16 %v137, %v134
    %v177 = vpack.c.b16 %v138, %v135
    %v178 = vpack.c.b16 %v139, %v136
    %v179 = vpack.c.b16 %v143, %v140
    %v180 = vpack.c.b16 %v144, %v141
    %v181 = vpack.c.b16 %v145, %v142
    %v182 = vpack.c.b16 %v149, %v146
    %v183 = vpack.c.b16 %v150, %v147
    %v184 = vpack.c.b16 %v151, %v148
    %v185 = vpack.c.b16 %v155, %v152
    %v186 = vpack.c.b16 %v156, %v153
    %v187 = vpack.c.b16 %v157, %v154
    %v188 = vpack.c.b16 %v161, %v158
    %v189 = vpack.c.b16 %v162, %v159
    %v190 = vpack.c.b16 %v163, %v160
    %v191 = vpack.c.b16 %v167, %v164
    %v192 = vpack.c.b16 %v168, %v165
    %v193 = vpack.c.b16 %v169, %v166
    %218 = vmatprep.subr.bf16.mxu0 %v171
    %219 = vmatpush1.bf16.msra.mxu0 %v170
    %220 = vmatprep.subr.bf16.mxu0 %v174
    %221 = vmatpush1.bf16.msra.mxu0 %v173
    %222 = vmatprep.subr.bf16.mxu0 %v177
    %223 = vmatpush1.bf16.msra.mxu0 %v176
    %224 = vmatprep.subr.bf16.mxu0 %v180
    %225 = vmatpush1.bf16.msra.mxu0 %v179
    %226 = vmatprep.subr.bf16.mxu0 %v183
    %227 = vmatpush1.bf16.msra.mxu0 %v182
    %228 = vmatprep.subr.bf16.mxu0 %v186
    %229 = vmatpush1.bf16.msra.mxu0 %v185
    %230 = vmatprep.subr.bf16.mxu0 %v189
    %231 = vmatpush1.bf16.msra.mxu0 %v188
    %232 = vmatprep.subr.bf16.mxu0 %v192
    %233 = vmatpush1.bf16.msra.mxu0 %v191
    %234 = vmatprep.subr.bf16.mxu0 0
    %235 = vmatpush1.bf16.msra.mxu0 0
    %236 = vmatprep.subr.bf16.mxu0 0
    %237 = vmatpush1.bf16.msra.mxu0 0
    %238 = vmatprep.subr.bf16.mxu0 0
    %239 = vmatpush1.bf16.msra.mxu0 0
    %240 = vmatprep.subr.bf16.mxu0 0
    %241 = vmatpush1.bf16.msra.mxu0 0
    %242 = vmatprep.subr.bf16.mxu0 0
    %243 = vmatpush1.bf16.msra.mxu0 0
    %244 = vmatprep.subr.bf16.mxu0 0
    %245 = vmatpush1.bf16.msra.mxu0 0
    %246 = vmatprep.subr.bf16.mxu0 0
    %247 = vmatpush1.bf16.msra.mxu0 0
    %248 = vmatprep.subr.bf16.mxu0 0
    %249 = vmatpush1.bf16.msra.mxu0 0
    %250 = vmatprep.mubr.bf16.mxu0 0
    %251 = vmatmul.mubr.bf16.gmra.mrb[0].mxu0 %v88
    %v252 = vpop.f32.mrb[0].mxu0
    %v253 = vadd.f32 %v72, %v252
    %v254 = vpop.f32.mrb[0].mxu0
    %v255 = vadd.f32 %v76, %v254
    %v256 = vpop.f32.mrb[0].mxu0
    %v257 = vadd.f32 %v72, %v256
    %v258 = vpop.f32.mrb[0].mxu0
    %v259 = vadd.f32 %v76, %v258
    %260 = vdwg.mxu0
    %261 = vmatprep.subr.bf16.mxu0 0
    %262 = vmatpush1.bf16.msra.mxu0 %v172
    %263 = vmatprep.subr.bf16.mxu0 0
    %264 = vmatpush1.bf16.msra.mxu0 %v175
    %265 = vmatprep.subr.bf16.mxu0 0
    %266 = vmatpush1.bf16.msra.mxu0 %v178
    %267 = vmatprep.subr.bf16.mxu0 0
    %268 = vmatpush1.bf16.msra.mxu0 %v181
    %269 = vmatprep.subr.bf16.mxu0 0
    %270 = vmatpush1.bf16.msra.mxu0 %v184
    %271 = vmatprep.subr.bf16.mxu0 0
    %272 = vmatpush1.bf16.msra.mxu0 %v187
    %273 = vmatprep.subr.bf16.mxu0 0
    %274 = vmatpush1.bf16.msra.mxu0 %v190
    %275 = vmatprep.subr.bf16.mxu0 0
    %276 = vmatpush1.bf16.msra.mxu0 %v193
    %277 = vmatprep.subr.bf16.mxu0 0
    %278 = vmatpush1.bf16.msra.mxu0 0
    %279 = vmatprep.subr.bf16.mxu0 0
    %280 = vmatpush1.bf16.msra.mxu0 0
    %281 = vmatprep.subr.bf16.mxu0 0
    %282 = vmatpush1.bf16.msra.mxu0 0
    %283 = vmatprep.subr.bf16.mxu0 0
    %284 = vmatpush1.bf16.msra.mxu0 0
    %285 = vmatprep.subr.bf16.mxu0 0
    %286 = vmatpush1.bf16.msra.mxu0 0
    %287 = vmatprep.subr.bf16.mxu0 0
    %288 = vmatpush1.bf16.msra.mxu0 0
    %289 = vmatprep.subr.bf16.mxu0 0
    %290 = vmatpush1.bf16.msra.mxu0 0
    %291 = vmatprep.subr.bf16.mxu0 0
    %292 = vmatpush1.bf16.msra.mxu0 0
    %293 = vmatprep.mubr.bf16.mxu0 0
    %294 = vmatmul.mubr.bf16.gmra.mrb[0].mxu0 %v88
    %v295 = vpop.f32.mrb[0].mxu0
    %v296 = vadd.f32 %v80, %v295
    %v297 = vpop.f32.mrb[0].mxu0
    %v298 = vpop.f32.mrb[0].mxu0
    %v299 = vadd.f32 %v80, %v298
    %v300 = vpop.f32.mrb[0].mxu0
    %301 = vdwg.mxu0
    %v302 = vmax.f32 %v253, 0.0
    %v303 = vmax.f32 %v255, 0.0
    %v304 = vmax.f32 %v296, 0.0
    %v305 = vmax.f32 %v257, 0.0
    %v306 = vmax.f32 %v259, 0.0
    %v307 = vmax.f32 %v299, 0.0
    %v308 = vpack.c.bf16 %v305, %v302
    %v309 = vpack.c.bf16 %v306, %v303
    %v310 = vpack.c.bf16 %v307, %v304
    %v311 = vld [vmem:[%s4] sm:$0xf]
    %v312 = vld [vmem:[%s4 + $0x4] sm:$0xf]
    %v313 = vld [vmem:[%s4 + $0x8] sm:$0xf]
    %v314 = vld [vmem:[%s4 + $0xc] sm:$0xf]
    %v315 = vld [vmem:[%s4 + $0x10] sm:$0xf]
    %v316 = vld [vmem:[%s4 + $0x14] sm:$0xf]
    %v317 = vld [vmem:[%s4 + $0x18] sm:$0xf]
    %v318 = vld [vmem:[%s4 + $0x1c] sm:$0xf]
    %v319 = vld [vmem:[%s4 + $0x20] sm:$0xf]
    %v320 = vld [vmem:[%s4 + $0x24] sm:$0xf]
    %v321 = vld [vmem:[%s4 + $0x28] sm:$0xf]
    %v322 = vld [vmem:[%s4 + $0x2c] sm:$0xf]
    %v323 = vld [vmem:[%s4 + $0x30] sm:$0xf]
    %v324 = vld [vmem:[%s4 + $0x34] sm:$0xf]
    %v325 = vld [vmem:[%s4 + $0x38] sm:$0xf]
    %v326 = vld [vmem:[%s4 + $0x3c] sm:$0xf]
    %v327 = vld [vmem:[%s4 + $0x40] sm:$0xf]
    %v328 = vld [vmem:[%s4 + $0x44] sm:$0xf]
    %v329 = vld [vmem:[%s4 + $0x48] sm:$0xf]
    %v330 = vld [vmem:[%s4 + $0x4c] sm:$0xf]
    %v331 = vld [vmem:[%s4 + $0x50] sm:$0xf]
    %v332 = vld [vmem:[%s4 + $0x54] sm:$0xf]
    %v333 = vld [vmem:[%s4 + $0x58] sm:$0xf]
    %v334 = vld [vmem:[%s4 + $0x5c] sm:$0xf]
    %v335 = vld [vmem:[%s4 + $0x60] sm:$0xf]
    %v336 = vld [vmem:[%s4 + $0x64] sm:$0xf]
    %v337 = vld [vmem:[%s4 + $0x68] sm:$0xf]
    %v338 = vld [vmem:[%s4 + $0x6c] sm:$0xf]
    %v339 = vld [vmem:[%s4 + $0x70] sm:$0xf]
    %v340 = vld [vmem:[%s4 + $0x74] sm:$0xf]
    %v341 = vld [vmem:[%s4 + $0x78] sm:$0xf]
    %v342 = vld [vmem:[%s4 + $0x7c] sm:$0xf]
    %v343 = vld [vmem:[%s4 + $0x80] sm:$0xf]
    %v344 = vld [vmem:[%s4 + $0x84] sm:$0xf]
    %v345 = vld [vmem:[%s4 + $0x88] sm:$0xf]
    %v346 = vld [vmem:[%s4 + $0x8c] sm:$0xf]
    %v347 = vld [vmem:[%s4 + $0x90] sm:$0xf]
    %v348 = vld [vmem:[%s4 + $0x94] sm:$0xf]
    %v349 = vld [vmem:[%s4 + $0x98] sm:$0xf]
    %v350 = vld [vmem:[%s4 + $0x9c] sm:$0xf]
    %v351 = vld [vmem:[%s5] sm:$0x1]
    %v353 = vlaneseq
    %v354 = vshrl.u32 %v353, 7
    %v355 = vsub.s32 0, %v354
    %v356 = vrot.slane %v351, %v355
    %v398 = vunpack.c.l.b16 %v311
    %v399 = vunpack.c.l.b16 %v312
    %v400 = vunpack.c.l.b16 %v313
    %v401 = vunpack.c.l.b16 %v314
    %v402 = vunpack.c.l.b16 %v315
    %v403 = vunpack.c.l.b16 %v316
    %v404 = vunpack.c.l.b16 %v317
    %v405 = vunpack.c.l.b16 %v318
    %v406 = vunpack.c.l.b16 %v319
    %v407 = vunpack.c.l.b16 %v320
    %v408 = vunpack.c.l.b16 %v321
    %v409 = vunpack.c.l.b16 %v322
    %v410 = vunpack.c.l.b16 %v323
    %v411 = vunpack.c.l.b16 %v324
    %v412 = vunpack.c.l.b16 %v325
    %v413 = vunpack.c.l.b16 %v326
    %v414 = vunpack.c.l.b16 %v327
    %v415 = vunpack.c.l.b16 %v328
    %v416 = vunpack.c.l.b16 %v329
    %v417 = vunpack.c.l.b16 %v330
    %v418 = vunpack.c.l.b16 %v331
    %v419 = vunpack.c.l.b16 %v332
    %v420 = vunpack.c.l.b16 %v333
    %v421 = vunpack.c.l.b16 %v334
    %v422 = vunpack.c.l.b16 %v335
    %v423 = vunpack.c.l.b16 %v336
    %v424 = vunpack.c.l.b16 %v337
    %v425 = vunpack.c.l.b16 %v338
    %v426 = vunpack.c.l.b16 %v339
    %v427 = vunpack.c.l.b16 %v340
    %v428 = vunpack.c.l.b16 %v341
    %v429 = vunpack.c.l.b16 %v342
    %v430 = vunpack.c.l.b16 %v343
    %v431 = vunpack.c.l.b16 %v344
    %v432 = vunpack.c.l.b16 %v345
    %v433 = vunpack.c.l.b16 %v346
    %v434 = vunpack.c.l.b16 %v347
    %v435 = vunpack.c.l.b16 %v348
    %v436 = vunpack.c.l.b16 %v349
    %v437 = vunpack.c.l.b16 %v350
    %v438 = vpack.c.b16 %v399, %v398
    %v439 = vpack.c.b16 %v401, %v400
    %v440 = vpack.c.b16 %v403, %v402
    %v441 = vpack.c.b16 %v405, %v404
    %v442 = vpack.c.b16 %v407, %v406
    %v443 = vpack.c.b16 %v409, %v408
    %v444 = vpack.c.b16 %v411, %v410
    %v445 = vpack.c.b16 %v413, %v412
    %v446 = vpack.c.b16 %v415, %v414
    %v447 = vpack.c.b16 %v417, %v416
    %v448 = vpack.c.b16 %v419, %v418
    %v449 = vpack.c.b16 %v421, %v420
    %v450 = vpack.c.b16 %v423, %v422
    %v451 = vpack.c.b16 %v425, %v424
    %v452 = vpack.c.b16 %v427, %v426
    %v453 = vpack.c.b16 %v429, %v428
    %v454 = vpack.c.b16 %v431, %v430
    %v455 = vpack.c.b16 %v433, %v432
    %v456 = vpack.c.b16 %v435, %v434
    %v457 = vpack.c.b16 %v437, %v436
    %vm478 = vcmask 523264
    %v480 = vsel %vm478, %v310, 0
    %482 = vmatprep.subr.bf16.mxu0 0
    %483 = vmatpush1.bf16.msra.mxu0 %v438
    %484 = vmatprep.subr.bf16.mxu0 0
    %485 = vmatpush1.bf16.msra.mxu0 %v439
    %486 = vmatprep.subr.bf16.mxu0 0
    %487 = vmatpush1.bf16.msra.mxu0 %v440
    %488 = vmatprep.subr.bf16.mxu0 0
    %489 = vmatpush1.bf16.msra.mxu0 %v441
    %490 = vmatprep.subr.bf16.mxu0 0
    %491 = vmatpush1.bf16.msra.mxu0 %v442
    %492 = vmatprep.subr.bf16.mxu0 0
    %493 = vmatpush1.bf16.msra.mxu0 %v443
    %494 = vmatprep.subr.bf16.mxu0 0
    %495 = vmatpush1.bf16.msra.mxu0 %v444
    %496 = vmatprep.subr.bf16.mxu0 0
    %497 = vmatpush1.bf16.msra.mxu0 %v445
    %498 = vmatprep.subr.bf16.mxu0 0
    %499 = vmatpush1.bf16.msra.mxu0 %v446
    %500 = vmatprep.subr.bf16.mxu0 0
    %501 = vmatpush1.bf16.msra.mxu0 %v447
    %502 = vmatprep.subr.bf16.mxu0 0
    %503 = vmatpush1.bf16.msra.mxu0 %v448
    %504 = vmatprep.subr.bf16.mxu0 0
    %505 = vmatpush1.bf16.msra.mxu0 %v449
    %506 = vmatprep.subr.bf16.mxu0 0
    %507 = vmatpush1.bf16.msra.mxu0 %v450
    %508 = vmatprep.subr.bf16.mxu0 0
    %509 = vmatpush1.bf16.msra.mxu0 %v451
    %510 = vmatprep.subr.bf16.mxu0 0
    %511 = vmatpush1.bf16.msra.mxu0 %v452
    %512 = vmatprep.subr.bf16.mxu0 0
    %513 = vmatpush1.bf16.msra.mxu0 %v453
    %514 = vmatprep.mubr.bf16.mxu0 %v309
    %515 = vmatmul.mubr.bf16.gmra.mrb[0].mxu0 %v308
    %v516 = vpop.f32.mrb[0].mxu0
    %v517 = vadd.f32 %v356, %v516
    %v518 = vpop.f32.mrb[0].mxu0
    %v519 = vpop.f32.mrb[0].mxu0
    %v520 = vadd.f32 %v356, %v519
    %v521 = vpop.f32.mrb[0].mxu0
    %522 = vdwg.mxu0
    %523 = vmatprep.subr.bf16.mxu0 0
    %524 = vmatpush1.bf16.msra.mxu0 %v454
    %525 = vmatprep.subr.bf16.mxu0 0
    %526 = vmatpush1.bf16.msra.mxu0 %v455
    %527 = vmatprep.subr.bf16.mxu0 0
    %528 = vmatpush1.bf16.msra.mxu0 %v456
    %529 = vmatprep.subr.bf16.mxu0 0
    %530 = vmatpush1.bf16.msra.mxu0 %v457
    %531 = vmatprep.subr.bf16.mxu0 0
    %532 = vmatpush1.bf16.msra.mxu0 0
    %533 = vmatprep.subr.bf16.mxu0 0
    %534 = vmatpush1.bf16.msra.mxu0 0
    %535 = vmatprep.subr.bf16.mxu0 0
    %536 = vmatpush1.bf16.msra.mxu0 0
    %537 = vmatprep.subr.bf16.mxu0 0
    %538 = vmatpush1.bf16.msra.mxu0 0
    %539 = vmatprep.subr.bf16.mxu0 0
    %540 = vmatpush1.bf16.msra.mxu0 0
    %541 = vmatprep.subr.bf16.mxu0 0
    %542 = vmatpush1.bf16.msra.mxu0 0
    %543 = vmatprep.subr.bf16.mxu0 0
    %544 = vmatpush1.bf16.msra.mxu0 0
    %545 = vmatprep.subr.bf16.mxu0 0
    %546 = vmatpush1.bf16.msra.mxu0 0
    %547 = vmatprep.subr.bf16.mxu0 0
    %548 = vmatpush1.bf16.msra.mxu0 0
    %549 = vmatprep.subr.bf16.mxu0 0
    %550 = vmatpush1.bf16.msra.mxu0 0
    %551 = vmatprep.subr.bf16.mxu0 0
    %552 = vmatpush1.bf16.msra.mxu0 0
    %553 = vmatprep.subr.bf16.mxu0 0
    %554 = vmatpush1.bf16.msra.mxu0 0
    %555 = vmatprep.mubr.bf16.mxu0 0
    %556 = vmatmul.mubr.bf16.gmra.mrb[0].mxu0 %v480
    %v557 = vpop.f32.mrb[0].mxu0
    %v558 = vadd.f32 %v517, %v557
    %v559 = vpop.f32.mrb[0].mxu0
    %v560 = vpop.f32.mrb[0].mxu0
    %v561 = vadd.f32 %v520, %v560
    %v562 = vpop.f32.mrb[0].mxu0
    %563 = vdwg.mxu0
    %564 = vst [vmem:[#allocation4] sm:$0xff] %v558
    %565 = vst [vmem:[#allocation4 + $0x8] sm:$0xff] %v561
    %v566 = vld [vmem:[%s6] sm:$0xff]
    %v567 = vld [vmem:[%s6 + $0x8] sm:$0xff]
    %v568 = vld [vmem:[%s6 + $0x10] sm:$0xff]
    %v569 = vld [vmem:[%s6 + $0x18] sm:$0xff]
    %v570 = vld [vmem:[%s6 + $0x20] sm:$0xff]
    %v571 = vld [vmem:[%s6 + $0x28] sm:$0xff]
    %v572 = vld [vmem:[%s6 + $0x30] sm:$0xff]
    %v573 = vld [vmem:[%s6 + $0x38] sm:$0xff]
    %v574 = vld [vmem:[%s6 + $0x40] sm:$0xff]
    %v575 = vld [vmem:[%s6 + $0x48] sm:$0xff]
    %v576 = vld [vmem:[%s6 + $0x50] sm:$0xff]
    %v577 = vld [vmem:[%s6 + $0x58] sm:$0xff]
    %v578 = vld [vmem:[%s6 + $0x60] sm:$0xff]
    %v579 = vld [vmem:[%s6 + $0x68] sm:$0xff]
    %v580 = vld [vmem:[%s6 + $0x70] sm:$0xff]
    %v581 = vld [vmem:[%s6 + $0x78] sm:$0xff]
    %v582 = vld [vmem:[%s6 + $0x80] sm:$0xff]
    %v583 = vld [vmem:[%s6 + $0x88] sm:$0xff]
    %v584 = vld [vmem:[%s6 + $0x90] sm:$0xff]
    %v585 = vld [vmem:[%s6 + $0x98] sm:$0xff]
    %v586 = vld [vmem:[%s6 + $0xa0] sm:$0xff]
    %v587 = vld [vmem:[%s6 + $0xa8] sm:$0xff]
    %v588 = vld [vmem:[%s6 + $0xb0] sm:$0xff]
    %v589 = vld [vmem:[%s6 + $0xb8] sm:$0xff]
    %v590 = vld [vmem:[%s6 + $0xc0] sm:$0xff]
    %v591 = vld [vmem:[%s6 + $0xc8] sm:$0xff]
    %v592 = vld [vmem:[%s6 + $0xd0] sm:$0xff]
    %v593 = vld [vmem:[%s6 + $0xd8] sm:$0xff]
    %v594 = vld [vmem:[%s6 + $0xe0] sm:$0xff]
    %v595 = vld [vmem:[%s6 + $0xe8] sm:$0xff]
    %v596 = vld [vmem:[%s6 + $0xf0] sm:$0xff]
    %v597 = vld [vmem:[%s6 + $0xf8] sm:$0xff]
    %v598 = vld [vmem:[%s6 + $0x100] sm:$0xff]
    %v599 = vld [vmem:[%s6 + $0x108] sm:$0xff]
    %v600 = vld [vmem:[%s6 + $0x110] sm:$0xff]
    %v601 = vld [vmem:[%s6 + $0x118] sm:$0xff]
    %v602 = vld [vmem:[%s6 + $0x120] sm:$0xff]
    %v603 = vld [vmem:[%s6 + $0x128] sm:$0xff]
    %v604 = vld [vmem:[%s6 + $0x130] sm:$0xff]
    %v605 = vld [vmem:[%s6 + $0x138] sm:$0xff]
    %v606 = vld [vmem:[%s7] sm:$0x1]
    %v608 = vlaneseq
    %v609 = vshrl.u32 %v608, 7
    %v610 = vsub.s32 0, %v609
    %v611 = vrot.slane %v606, %v610
    %v614 = vsel %vm478, %v304, 0
    %v617 = vsel %vm478, %v307, 0
    %619 = vmatprep.subr.mxu0 0.0
    %620 = vmatpush1.msra.mxu0 %v566
    %621 = vmatprep.subr.mxu0 0.0
    %622 = vmatpush1.msra.mxu0 %v567
    %623 = vmatprep.subr.mxu0 0.0
    %624 = vmatpush1.msra.mxu0 %v568
    %625 = vmatprep.subr.mxu0 0.0
    %626 = vmatpush1.msra.mxu0 %v569
    %627 = vmatprep.subr.mxu0 0.0
    %628 = vmatpush1.msra.mxu0 %v570
    %629 = vmatprep.subr.mxu0 0.0
    %630 = vmatpush1.msra.mxu0 %v571
    %631 = vmatprep.subr.mxu0 0.0
    %632 = vmatpush1.msra.mxu0 %v572
    %633 = vmatprep.subr.mxu0 0.0
    %634 = vmatpush1.msra.mxu0 %v573
    %635 = vmatprep.subr.mxu0 0.0
    %636 = vmatpush1.msra.mxu0 %v574
    %637 = vmatprep.subr.mxu0 0.0
    %638 = vmatpush1.msra.mxu0 %v575
    %639 = vmatprep.subr.mxu0 0.0
    %640 = vmatpush1.msra.mxu0 %v576
    %641 = vmatprep.subr.mxu0 0.0
    %642 = vmatpush1.msra.mxu0 %v577
    %643 = vmatprep.subr.mxu0 0.0
    %644 = vmatpush1.msra.mxu0 %v578
    %645 = vmatprep.subr.mxu0 0.0
    %646 = vmatpush1.msra.mxu0 %v579
    %647 = vmatprep.subr.mxu0 0.0
    %648 = vmatpush1.msra.mxu0 %v580
    %649 = vmatprep.subr.mxu0 0.0
    %650 = vmatpush1.msra.mxu0 %v581
    %651 = vmatprep.subr.mxu0 0.0
    %652 = vmatpush1.msra.mxu0 %v582
    %653 = vmatprep.subr.mxu0 0.0
    %654 = vmatpush1.msra.mxu0 %v583
    %655 = vmatprep.subr.mxu0 0.0
    %656 = vmatpush1.msra.mxu0 %v584
    %657 = vmatprep.subr.mxu0 0.0
    %658 = vmatpush1.msra.mxu0 %v585
    %659 = vmatprep.subr.mxu0 0.0
    %660 = vmatpush1.msra.mxu0 %v586
    %661 = vmatprep.subr.mxu0 0.0
    %662 = vmatpush1.msra.mxu0 %v587
    %663 = vmatprep.subr.mxu0 0.0
    %664 = vmatpush1.msra.mxu0 %v588
    %665 = vmatprep.subr.mxu0 0.0
    %666 = vmatpush1.msra.mxu0 %v589
    %667 = vmatprep.subr.mxu0 0.0
    %668 = vmatpush1.msra.mxu0 %v590
    %669 = vmatprep.subr.mxu0 0.0
    %670 = vmatpush1.msra.mxu0 %v591
    %671 = vmatprep.subr.mxu0 0.0
    %672 = vmatpush1.msra.mxu0 %v592
    %673 = vmatprep.subr.mxu0 0.0
    %674 = vmatpush1.msra.mxu0 %v593
    %675 = vmatprep.subr.mxu0 0.0
    %676 = vmatpush1.msra.mxu0 %v594
    %677 = vmatprep.subr.mxu0 0.0
    %678 = vmatpush1.msra.mxu0 %v595
    %679 = vmatprep.subr.mxu0 0.0
    %680 = vmatpush1.msra.mxu0 %v596
    %681 = vmatprep.subr.mxu0 0.0
    %682 = vmatpush1.msra.mxu0 %v597
    %683 = vmatprep.mubr.f32.mxu0 %v303
    %684 = vmatmul.mubr.f32.gmra.mrb[0].mxu0 %v302
    %v685 = vpop.f32.mrb[0].mxu0
    %v686 = vadd.f32 %v611, %v685
    %v687 = vpop.f32.mrb[0].mxu0
    %688 = vmatprep.mubr.f32.mxu0 %v306
    %689 = vmatmul.mubr.f32.gmra.mrb[0].mxu0 %v305
    %v690 = vpop.f32.mrb[0].mxu0
    %v691 = vadd.f32 %v611, %v690
    %v692 = vpop.f32.mrb[0].mxu0
    %693 = vdwg.mxu0
    %694 = vmatprep.subr.mxu0 0.0
    %695 = vmatpush1.msra.mxu0 %v598
    %696 = vmatprep.subr.mxu0 0.0
    %697 = vmatpush1.msra.mxu0 %v599
    %698 = vmatprep.subr.mxu0 0.0
    %699 = vmatpush1.msra.mxu0 %v600
    %700 = vmatprep.subr.mxu0 0.0
    %701 = vmatpush1.msra.mxu0 %v601
    %702 = vmatprep.subr.mxu0 0.0
    %703 = vmatpush1.msra.mxu0 %v602
    %704 = vmatprep.subr.mxu0 0.0
    %705 = vmatpush1.msra.mxu0 %v603
    %706 = vmatprep.subr.mxu0 0.0
    %707 = vmatpush1.msra.mxu0 %v604
    %708 = vmatprep.subr.mxu0 0.0
    %709 = vmatpush1.msra.mxu0 %v605
    %710 = vmatprep.subr.mxu0 0.0
    %711 = vmatpush1.msra.mxu0 0.0
    %712 = vmatprep.subr.mxu0 0.0
    %713 = vmatpush1.msra.mxu0 0.0
    %714 = vmatprep.subr.mxu0 0.0
    %715 = vmatpush1.msra.mxu0 0.0
    %716 = vmatprep.subr.mxu0 0.0
    %717 = vmatpush1.msra.mxu0 0.0
    %718 = vmatprep.subr.mxu0 0.0
    %719 = vmatpush1.msra.mxu0 0.0
    %720 = vmatprep.subr.mxu0 0.0
    %721 = vmatpush1.msra.mxu0 0.0
    %722 = vmatprep.subr.mxu0 0.0
    %723 = vmatpush1.msra.mxu0 0.0
    %724 = vmatprep.subr.mxu0 0.0
    %725 = vmatpush1.msra.mxu0 0.0
    %726 = vmatprep.subr.mxu0 0.0
    %727 = vmatpush1.msra.mxu0 0.0
    %728 = vmatprep.subr.mxu0 0.0
    %729 = vmatpush1.msra.mxu0 0.0
    %730 = vmatprep.subr.mxu0 0.0
    %731 = vmatpush1.msra.mxu0 0.0
    %732 = vmatprep.subr.mxu0 0.0
    %733 = vmatpush1.msra.mxu0 0.0
    %734 = vmatprep.subr.mxu0 0.0
    %735 = vmatpush1.msra.mxu0 0.0
    %736 = vmatprep.subr.mxu0 0.0
    %737 = vmatpush1.msra.mxu0 0.0
    %738 = vmatprep.subr.mxu0 0.0
    %739 = vmatpush1.msra.mxu0 0.0
    %740 = vmatprep.subr.mxu0 0.0
    %741 = vmatpush1.msra.mxu0 0.0
    %742 = vmatprep.subr.mxu0 0.0
    %743 = vmatpush1.msra.mxu0 0.0
    %744 = vmatprep.subr.mxu0 0.0
    %745 = vmatpush1.msra.mxu0 0.0
    %746 = vmatprep.subr.mxu0 0.0
    %747 = vmatpush1.msra.mxu0 0.0
    %748 = vmatprep.subr.mxu0 0.0
    %749 = vmatpush1.msra.mxu0 0.0
    %750 = vmatprep.subr.mxu0 0.0
    %751 = vmatpush1.msra.mxu0 0.0
    %752 = vmatprep.subr.mxu0 0.0
    %753 = vmatpush1.msra.mxu0 0.0
    %754 = vmatprep.subr.mxu0 0.0
    %755 = vmatpush1.msra.mxu0 0.0
    %756 = vmatprep.subr.mxu0 0.0
    %757 = vmatpush1.msra.mxu0 0.0
    %758 = vmatprep.mubr.f32.mxu0 0.0
    %759 = vmatmul.mubr.f32.gmra.mrb[0].mxu0 %v614
    %v760 = vpop.f32.mrb[0].mxu0
    %v761 = vadd.f32 %v686, %v760
    %v762 = vpop.f32.mrb[0].mxu0
    %763 = vmatprep.mubr.f32.mxu0 0.0
    %764 = vmatmul.mubr.f32.gmra.mrb[0].mxu0 %v617
    %v765 = vpop.f32.mrb[0].mxu0
    %v766 = vadd.f32 %v691, %v765
    %v767 = vpop.f32.mrb[0].mxu0
    %768 = vdwg.mxu0
    %v769 = vmul.f32 %v761, %v761
    %v770 = vmul.f32 %v766, %v766
    %v771 = vlaneseq
    %v772 = vshrl.u32 %v771, 7
    %v773 = vadd.s32 %v772, 8
    %s774 = smul.u32 0, 16
    %v775 = vstv %s774
    %v776 = vadd.s32 %v772, %v775
    %v777 = vadd.s32 %v773, %v775
    %v778 = vlaneseq
    %v779 = vand.u32 %v778, 127
    %vm780 = vcmp.ge.s32.totalorder %v779, 32
    %v781 = vsel %vm780, 1, 0
    %v782 = vmul.u32 %v776, 2
    %v783 = vmul.u32 %v777, 2
    %v784 = vadd.s32 %v782, %v781
    %v785 = vadd.s32 %v783, %v781
    %s786 = sld [smem:[#allocation3]]
    %v787 = vstv %s786
    %vm788 = vcmp.lt.s32.totalorder %v784, %v787
    %vm789 = vcmp.lt.s32.totalorder %v785, %v787
    %v790 = vsel %vm788, %v769, 0.0
    %v791 = vsel %vm789, %v770, 0.0
    %v792 = vsel %vm478, %v790, 0.0
    %v793 = vsel %vm478, %v791, 0.0
    %v794 = vadd.f32 %v792, %v793
    %795 = vadd.xlane.f32.xlu0 %v794
    %v796 = vpop.xlane.xlu0 %795
    %v797 = vrot.slane %v796, 4
    %v798 = vadd.f32 %v796, %v797
    %v799 = vrot.slane %v798, 2
    %v800 = vadd.f32 %v798, %v799
    %v801 = vrot.slane %v800, 1
    %v802 = vadd.f32 %v800, %v801
    %s803 = vtos %v802
    %v804 = vstv %s803
    %805 = vst [vmem:[#allocation6] sm:$0xff] %v804
    // Predicated region
    $region30: #{tpu_custom_call.1} parent=1 // pred_check
      _
    $region31: #{tpu_custom_call.1} parent=1 // pred_check_branch
      %807 = sbr.rel (0) target = $region33
    $region32: #{tpu_custom_call.1} parent=1 // pred_region
      %s809 = ssub.s32 256, 256
      %810 = vsyncadd [#allocation5], %s809
      %s811 = sshll.u32 [#allocation4], 4
      %s812 = int_to_ptr.vmem [resolvable:$true] %s811
      %817 = dma.vmem_to_hbm [thread:$0]  %s812, 256, %s8, [#allocation5], 128, 128, 8
    $region33: #{tpu_custom_call.1} parent=1 // pred_fallthru
      _
    // Predicated region
    $region34: #{tpu_custom_call.1} parent=1 // pred_check
      _
    $region35: #{tpu_custom_call.1} parent=1 // pred_check_branch
      %819 = sbr.rel (0) target = $region37
    $region36: #{tpu_custom_call.1} parent=1 // pred_region
      %s821 = ssub.s32 128, 128
      %822 = vsyncadd [#allocation7], %s821
      %s824 = sshll.u32 [#allocation6], 4
      %s825 = int_to_ptr.vmem [resolvable:$true] %s824
      %827 = dma.vmem_to_hbm [thread:$0]  %s825, 128, %s9, [#allocation7]
    $region37: #{tpu_custom_call.1} parent=1 // pred_fallthru
      _
    // Predicated region
    $region38: #{tpu_custom_call.1} parent=1 // pred_check
      _
    $region39: #{tpu_custom_call.1} parent=1 // pred_check_branch
      %829 = sbr.rel (0) target = $region41
    $region40: #{tpu_custom_call.1} parent=1 // pred_region
      %830 = dma.done [#allocation5], 256
    $region41: #{tpu_custom_call.1} parent=1 // pred_fallthru
      _
    // Predicated region
    $region42: #{tpu_custom_call.1} parent=1 // pred_check
      _
    $region43: #{tpu_custom_call.1} parent=1 // pred_check_branch
      %832 = sbr.rel (0) target = $region45
    $region44: #{tpu_custom_call.1} parent=1 // pred_region
      %833 = dma.done [#allocation7], 128
    $region45: #{tpu_custom_call.1} parent=1 // pred_fallthru
      _
    %834 = vsyncpa [#allocation5], 1
    %835 = vsyncpa [#allocation7], 1

</llo_original>
